<compile_context>
chip_gen: v7x
topology: tpu7x:2x2x1
jax: 0.10.0
libtpu: 0.0.40
codegen_flags: <defaults>
</compile_context>

<pallas_src>
import math
import functools

import jax
import jax.numpy as jnp
from jax import lax
from jax.experimental import pallas as pl
from jax.experimental.pallas import tpu as pltpu

_VMEM_LIMIT = 64 * 1024 * 1024  # safe ceiling on v5e / v6e / v7x


# ----------------------------------------------------------------------------
# Generic linear kernel: x(TN,E) @ W(E,D) + b  -> (TN,D), lane-dense output.
# Used to project K and V exactly once (hoisted out of the attention grid).
# ----------------------------------------------------------------------------
def _linear_kernel(x_ref, w_ref, b_ref, o_ref):
    acc = jnp.dot(x_ref[...], w_ref[...], preferred_element_type=jnp.float32)
    o_ref[...] = (acc + b_ref[...]).astype(o_ref.dtype)


def _linear(x, w, b, out_dtype, *, tok_tile=256):
    """x: (B, N, E), w: (E, D), b: (1, D) -> (B, N, D)."""
    B, N, E = x.shape
    D = w.shape[1]
    tn = N if N <= tok_tile else tok_tile
    grid = (B, pl.cdiv(N, tn))
    return pl.pallas_call(
        _linear_kernel,
        out_shape=jax.ShapeDtypeStruct((B, N, D), out_dtype),
        grid=grid,
        in_specs=[
            pl.BlockSpec((None, tn, E), lambda b, i: (b, i, 0)),
            pl.BlockSpec((E, D), lambda b, i: (0, 0)),
            pl.BlockSpec((1, D), lambda b, i: (0, 0)),
        ],
        out_specs=pl.BlockSpec((None, tn, D), lambda b, i: (b, i, 0)),
        compiler_params=pltpu.CompilerParams(
            dimension_semantics=("parallel", "parallel"),
            vmem_limit_bytes=_VMEM_LIMIT),
    )(x, w, b)


# ----------------------------------------------------------------------------
# Flash attention kernel (grid = (batch, q-block, kv-block)):
#   q projection once per q-tile (kv==0, cached in scratch),
#   online softmax over KV tiles, fused output projection at the last KV tile.
# ----------------------------------------------------------------------------
def _flash_mha_kernel(q_ref, kp_ref, vp_ref, wq_ref, bq_ref, wo_ref, bo_ref,
                      o_ref, qp_scr, m_scr, l_scr, acc_scr, *,
                      num_heads, head_dim, kv_tile, nk, mask_kv):
    """
    q_ref : (TQ, E)   raw query tokens (compute dtype)
    kp_ref: (TK, D)   projected keys   (compute dtype)
    vp_ref: (TK, D)   projected values (compute dtype)
    wq_ref: (E, D)    q-projection weight, 1/sqrt(d) folded in (compute dtype)
    bq_ref: (1, D)    q-projection bias,  1/sqrt(d) folded in (f32)
    wo_ref: (D, E)    output-projection weight (compute dtype)
    bo_ref: (1, E)    output-projection bias (f32)
    o_ref : (TQ, E)
    scratch: qp_scr (TQ, D) cd; m_scr/l_scr (TQ, H) f32; acc_scr (TQ, D) f32
    """
    f32 = jnp.float32
    fmax = jnp.finfo(f32).max
    cd = qp_scr.dtype
    kv = pl.program_id(2)

    @pl.when(kv == 0)
    def _init():
        m_scr[...] = jnp.full(m_scr.shape, -jnp.inf, dtype=f32)
        l_scr[...] = jnp.zeros(l_scr.shape, dtype=f32)
        acc_scr[...] = jnp.zeros(acc_scr.shape, dtype=f32)
        # Full-width (lane-dense) Q projection, computed once per q-tile.
        qp = jnp.dot(q_ref[...], wq_ref[...],
                     preferred_element_type=f32) + bq_ref[...]
        qp_scr[...] = qp.astype(cd)

    kp = kp_ref[...]
    vp = vp_ref[...]

    if mask_kv:
        # Zero out-of-range V rows so 0-probability padded columns cannot
        # contribute NaN/Inf garbage through the PV matmul.
        row = lax.broadcasted_iota(jnp.int32, (kv_tile, 1), 0) + kv * kv_tile
        vp = jnp.where(row < nk, vp, jnp.zeros_like(vp))

    # Static head loop; head selection is a static lane slice of the D-wide
    # projected activations (no transposes, no concatenates).
    for h in range(num_heads):
        sl = slice(h * head_dim, (h + 1) * head_dim)
        hh = slice(h, h + 1)

        qh = qp_scr[:, sl]                                   # (TQ, d)
        s = lax.dot_general(qh, kp[:, sl], (((1,), (1,)), ((), ())),
                            preferred_element_type=f32)      # (TQ, TK)

        # torch parity: attn[attn == +/-inf] = +/-fmax (finite unchanged,
        # NaN preserved).  Note 1/sqrt(d) is pre-folded into Wq.
        s = jnp.clip(s, -fmax, fmax)
        if mask_kv:
            col = lax.broadcasted_iota(jnp.int32, s.shape, 1) + kv * kv_tile
            s = jnp.where(col < nk, s, -jnp.inf)

        # Online (streaming) softmax update; all stats kept in f32.
        m_prev = m_scr[:, hh]
        m_new = jnp.maximum(m_prev, jnp.max(s, axis=-1, keepdims=True))
        alpha = jnp.exp(m_prev - m_new)
        p = jnp.exp(s - m_new)
        l_scr[:, hh] = alpha * l_scr[:, hh] + jnp.sum(p, axis=-1, keepdims=True)
        acc_scr[:, sl] = alpha * acc_scr[:, sl] + jnp.dot(
            p.astype(cd), vp[:, sl], preferred_element_type=f32)
        m_scr[:, hh] = m_new

    @pl.when(kv == pl.num_programs(2) - 1)
    def _finalize():
        # Normalize the (TQ, d) contexts (cheap) rather than the (TQ, TK)
        # probabilities; reciprocal seeded on the EUP + one Newton step.
        for h in range(num_heads):
            sl = slice(h * head_dim, (h + 1) * head_dim)
            l_h = l_scr[:, h:h + 1]
            r = pl.reciprocal(l_h, approx=True)
            r = r * (2.0 - l_h * r)
            acc_scr[:, sl] = acc_scr[:, sl] * r
        # Single full-depth (TQ, D) @ (D, E) output projection.
        out = jnp.dot(acc_scr[...].astype(cd), wo_ref[...],
                      preferred_element_type=f32)
        o_ref[...] = (out + bo_ref[...]).astype(o_ref.dtype)


# ----------------------------------------------------------------------------
# Wrapper
# ----------------------------------------------------------------------------
def attention_forward(params, q, k, v, num_heads, *, q_tile=256, kv_tile=512,
                      compute_dtype=None):
    """q: (B, Nq, E), k/v: (B, Nk, E) -> (B, Nq, E)."""
    B, Nq, E = q.shape
    Nk = k.shape[1]
    D = params["q_w"].shape[1]          # internal_dim
    assert D % num_heads == 0, "num_heads must divide internal_dim"
    H = num_heads
    d = D // H
    scale = 1.0 / math.sqrt(d)

    f32 = jnp.float32
    out_dtype = q.dtype
    cd = jnp.dtype(compute_dtype) if compute_dtype is not None else q.dtype

    # MXU operands in the compute dtype; biases stay f32 (added to f32 acc).
    wq = (params["q_w"].astype(f32) * scale).astype(cd)   # fold 1/sqrt(d)
    bq = (params["q_b"].astype(f32) * scale).reshape(1, D)
    wk = params["k_w"].astype(cd)
    bk = params["k_b"].astype(f32).reshape(1, D)
    wv = params["v_w"].astype(cd)
    bv = params["v_b"].astype(f32).reshape(1, D)
    wo = params["out_w"].astype(cd)
    bo = params["out_b"].astype(f32).reshape(1, E)

    qc = q.astype(cd)
    kc = k.astype(cd)
    vc = v.astype(cd)

    # --- K/V projections: computed exactly once (hoisted out of the grid). ---
    kp = _linear(kc, wk, bk, cd)        # (B, Nk, D)
    vp = _linear(vc, wv, bv, cd)        # (B, Nk, D)

    tq = Nq if Nq <= q_tile else q_tile
    tk = Nk if Nk <= kv_tile else kv_tile
    nq_blocks = pl.cdiv(Nq, tq)
    nk_blocks = pl.cdiv(Nk, tk)
    mask_kv = (Nk % tk) != 0

    kernel = functools.partial(
        _flash_mha_kernel, num_heads=H, head_dim=d, kv_tile=tk, nk=Nk,
        mask_kv=mask_kv)

    grid = (B, nq_blocks, nk_blocks)
    in_specs = [
        pl.BlockSpec((None, tq, E), lambda b, i, kv: (b, i, 0)),   # q tokens
        pl.BlockSpec((None, tk, D), lambda b, i, kv: (b, kv, 0)),  # K (proj.)
        pl.BlockSpec((None, tk, D), lambda b, i, kv: (b, kv, 0)),  # V (proj.)
        pl.BlockSpec((E, D), lambda b, i, kv: (0, 0)),             # wq (scaled)
        pl.BlockSpec((1, D), lambda b, i, kv: (0, 0)),             # bq (scaled)
        pl.BlockSpec((D, E), lambda b, i, kv: (0, 0)),             # wo
        pl.BlockSpec((1, E), lambda b, i, kv: (0, 0)),             # bo
    ]
    out_spec = pl.BlockSpec((None, tq, E), lambda b, i, kv: (b, i, 0))

    scratch = [
        pltpu.VMEM((tq, D), cd),    # cached projected Q for this q-tile
        pltpu.VMEM((tq, H), f32),   # running max, per head
        pltpu.VMEM((tq, H), f32),   # running denom, per head
        pltpu.VMEM((tq, D), f32),   # per-head context accumulator (f32)
    ]

    return pl.pallas_call(
        kernel,
        out_shape=jax.ShapeDtypeStruct((B, Nq, E), out_dtype),
        grid=grid,
        in_specs=in_specs,
        out_specs=out_spec,
        scratch_shapes=scratch,
        compiler_params=pltpu.CompilerParams(
            dimension_semantics=("parallel", "parallel", "arbitrary"),
            vmem_limit_bytes=_VMEM_LIMIT),
    )(qc, kp, vp, wq, bq, wo, bo)


# ----------------------------------------------------------------------------
# Parameter init (mimics nn.Linear default: uniform +/- 1/sqrt(fan_in))
# ----------------------------------------------------------------------------
def init_params(key, embedding_dim, internal_dim, dtype=jnp.float32):
    keys = jax.random.split(key, 8)

    def lin(kw, kb, fan_in, fan_out):
        bound = 1.0 / math.sqrt(fan_in)
        w = jax.random.uniform(kw, (fan_in, fan_out), dtype, -bound, bound)
        b = jax.random.uniform(kb, (fan_out,), dtype, -bound, bound)
        return w, b

    q_w, q_b = lin(keys[0], keys[1], embedding_dim, internal_dim)
    k_w, k_b = lin(keys[2], keys[3], embedding_dim, internal_dim)
    v_w, v_b = lin(keys[4], keys[5], embedding_dim, internal_dim)
    o_w, o_b = lin(keys[6], keys[7], internal_dim, embedding_dim)
    return dict(q_w=q_w, q_b=q_b, k_w=k_w, k_b=k_b, v_w=v_w, v_b=v_b,
                out_w=o_w, out_b=o_b)


# ----------------------------------------------------------------------------
# Reference (pure JAX) — mirrors the PyTorch module exactly
# ----------------------------------------------------------------------------
def _separate_heads(x, num_heads):
    b, n, c = x.shape
    return jnp.transpose(x.reshape(b, n, num_heads, c // num_heads), (0, 2, 1, 3))


def _recombine_heads(x):
    b, h, n, d = x.shape
    return jnp.transpose(x, (0, 2, 1, 3)).reshape(b, n, h * d)


def attention_ref(params, q, k, v, num_heads):
    def lin(x, w, b):
        return x @ w + b

    q_p = lin(q, params["q_w"], params["q_b"])
    k_p = lin(k, params["k_w"], params["k_b"])
    v_p = lin(v, params["v_w"], params["v_b"])
    qh = _separate_heads(q_p, num_heads)
    kh = _separate_heads(k_p, num_heads)
    vh = _separate_heads(v_p, num_heads)
    d = qh.shape[-1]
    attn = jnp.einsum("bhqd,bhkd->bhqk", qh, kh) / math.sqrt(d)
    fmax = jnp.finfo(attn.dtype).max
    attn = jnp.where(attn == jnp.inf, fmax, attn)
    attn = jnp.where(attn == -jnp.inf, -fmax, attn)
    attn = jax.nn.softmax(attn, axis=-1)
    oh = jnp.einsum("bhqk,bhkd->bhqd", attn, vh)
    o = _recombine_heads(oh)
    return lin(o, params["out_w"], params["out_b"])


if __name__ == "__main__":
    # Small shapes consistent with the module.
    B = 2            # batch
    Nq = 8           # query tokens
    Nk = 8           # key/value tokens
    E = 32           # embedding_dim
    num_heads = 4
    downsample_rate = 1
    internal_dim = E // downsample_rate

    key = jax.random.PRNGKey(0)
    kparam, kq, kk, kv = jax.random.split(key, 4)

    params = init_params(kparam, E, internal_dim)
    q = jax.random.normal(kq, (B, Nq, E), jnp.float32)
    k = jax.random.normal(kk, (B, Nk, E), jnp.float32)
    v = jax.random.normal(kv, (B, Nk, E), jnp.float32)

    ref = attention_ref(params, q, k, v, num_heads)

    # f32 path (exact parity within tolerance).
    out = attention_forward(params, q, k, v, num_heads)
    out = jax.block_until_ready(out)
    assert out.shape == (B, Nq, E)
    assert jnp.allclose(out, ref, atol=1e-4, rtol=1e-4), "mismatch vs reference"

    # bf16 MXU path (f32 accumulation + f32 softmax stats) — loose tolerance.
    out_bf = attention_forward(params, q, k, v, num_heads,
                               compute_dtype=jnp.bfloat16)
    out_bf = jax.block_until_ready(out_bf)
    assert jnp.allclose(out_bf.astype(jnp.float32), ref, atol=1e-1, rtol=1e-1), \
        "bf16 path mismatch vs reference"

    print("KERNEL_OK")
</pallas_src>

<mosaic_0001>
module attributes {stable_mosaic.version = 11 : i64} {
  func.func @_linear_kernel(%arg0: i32, %arg1: i32, %arg2: memref<1x8x32xf32, #tpu.memory_space<vmem>>, %arg3: memref<32x32xf32, #tpu.memory_space<vmem>>, %arg4: memref<1x32xf32, #tpu.memory_space<vmem>>, %arg5: memref<1x8x32xf32, #tpu.memory_space<vmem>>) attributes {dimension_semantics = [#tpu.dimension_semantics<parallel>, #tpu.dimension_semantics<parallel>], iteration_bounds = array<i64: 2, 1>, scalar_prefetch = 0 : i64, scratch_operands = 0 : i64, tpu.core_type = #tpu.core_type<tc>, window_params = [{transform_indices = @transform_0, window_bounds = array<i64: 1, 8, 32>}, {pipeline_mode = #tpu.pipeline_mode<synchronous>, transform_indices = @transform_1, window_bounds = array<i64: 32, 32>}, {pipeline_mode = #tpu.pipeline_mode<synchronous>, transform_indices = @transform_2, window_bounds = array<i64: 1, 32>}, {transform_indices = @transform_3, window_bounds = array<i64: 1, 8, 32>}]} {
    %c0 = arith.constant 0 : index
    %c0_0 = arith.constant 0 : index
    %c0_1 = arith.constant 0 : index
    %0 = vector.load %arg2[%c0, %c0_0, %c0_1] : memref<1x8x32xf32, #tpu.memory_space<vmem>>, vector<1x8x32xf32>
    %1 = vector.shape_cast %0 : vector<1x8x32xf32> to vector<8x32xf32>
    %c0_2 = arith.constant 0 : index
    %c0_3 = arith.constant 0 : index
    %2 = vector.load %arg3[%c0_2, %c0_3] : memref<32x32xf32, #tpu.memory_space<vmem>>, vector<32x32xf32>
    %cst = arith.constant dense<0.000000e+00> : vector<8x32xf32>
    %3 = tpu.matmul %1, %2, %cst {dimension_numbers = #tpu.dot_dimension_numbers<[1], [0], [0], [1], [0, 0, 1, 1], [], []>} : vector<8x32xf32>, vector<32x32xf32>, vector<8x32xf32> -> vector<8x32xf32>
    %c0_4 = arith.constant 0 : index
    %c0_5 = arith.constant 0 : index
    %4 = vector.load %arg4[%c0_4, %c0_5] : memref<1x32xf32, #tpu.memory_space<vmem>>, vector<1x32xf32>
    %5 = vector.broadcast %4 : vector<1x32xf32> to vector<8x32xf32>
    %6 = arith.addf %3, %5 : vector<8x32xf32>
    %c0_6 = arith.constant 0 : index
    %c0_7 = arith.constant 0 : index
    %c0_8 = arith.constant 0 : index
    %7 = vector.load %arg5[%c0_6, %c0_7, %c0_8] : memref<1x8x32xf32, #tpu.memory_space<vmem>>, vector<1x8x32xf32>
    %8 = vector.shape_cast %7 : vector<1x8x32xf32> to vector<8x32xf32>
    %9 = vector.shape_cast %6 : vector<8x32xf32> to vector<1x8x32xf32>
    tpu.vector_store %arg5[%c0_6, %c0_7, %c0_8], %9 {strides = array<i32>} : memref<1x8x32xf32, #tpu.memory_space<vmem>>, vector<1x8x32xf32>,
    return
  }
  func.func @transform_0(%arg0: i32, %arg1: i32) -> (i32, i32, i32) {
    %c0_i32 = arith.constant 0 : i32
    %c0_i32_0 = arith.constant 0 : i32
    return %arg0, %arg1, %c0_i32 : i32, i32, i32
  }
  func.func @transform_1(%arg0: i32, %arg1: i32) -> (i32, i32) {
    %c0_i32 = arith.constant 0 : i32
    %c0_i32_0 = arith.constant 0 : i32
    %c0_i32_1 = arith.constant 0 : i32
    return %c0_i32, %c0_i32_0 : i32, i32
  }
  func.func @transform_2(%arg0: i32, %arg1: i32) -> (i32, i32) {
    %c0_i32 = arith.constant 0 : i32
    %c0_i32_0 = arith.constant 0 : i32
    %c0_i32_1 = arith.constant 0 : i32
    return %c0_i32, %c0_i32_0 : i32, i32
  }
  func.func @transform_3(%arg0: i32, %arg1: i32) -> (i32, i32, i32) {
    %c0_i32 = arith.constant 0 : i32
    %c0_i32_0 = arith.constant 0 : i32
    return %arg0, %arg1, %c0_i32 : i32, i32, i32
  }
}

</mosaic_0001>

<llo_original>
// kernel: tpu_custom_call.1
$region0: #{tpu_custom_call.1}
  #allocation0 [shape = 'u32[]', space=smem, size = 0x4, offset = 0x4, fixed_abs, tag = 'smem constant byte address 0x4 - core index']
  #allocation1 [shape = 'u32[144,128]{1,0:T(1,128)}', space=vmem, size = 0x12000, scoped, tag = 'internal scratch']
  %s0 = inlined_call_operand.hbm [shape: f32[2,8,32], index: 0, kind: input, shape index: {}]
  %s1 = inlined_call_operand.hbm [shape: f32[32,32], index: 1, kind: input, shape index: {}]
  %s2 = inlined_call_operand.hbm [shape: f32[1,32], index: 2, kind: input, shape index: {}]
  %s3 = inlined_call_operand.hbm [shape: f32[2,8,32], index: 3, kind: output, shape index: {}]
  %s4 = sld [smem:[#allocation0]]
  $region57: #{tpu_custom_call.1} parent=0
    _
  %s6 = ssub.s32 1, %s4
  %s7 = scalar_select 0, %s6, %s4
  $region1: #{tpu_custom_call.1} parent=0
    #allocation2 [shape = 'u8[8192]{0}', space=vmem, size = 0x2000, scoped, tag = 'input window, operand 0']
    #allocation3 [shape = 's32[2]{0}', space=sflag, size = 0x8, scoped, tag = 'scoped memory for tpu_custom_call.1']
    #allocation4 [shape = 's32[2]{0}', space=sflag, size = 0x8, scoped, tag = 'scoped memory for tpu_custom_call.1']
    #allocation5 [shape = 'u8[16384]{0}', space=vmem, size = 0x4000, scoped, tag = 'input window, operand 1, single buffered']
    #allocation6 [shape = 's32[1]{0}', space=sflag, size = 0x4, scoped, tag = 'scoped memory for tpu_custom_call.1']
    #allocation7 [shape = 'u8[512]{0}', space=vmem, size = 0x400, scoped, tag = 'input window, operand 2, single buffered']
    #allocation8 [shape = 'u8[8192]{0}', space=vmem, size = 0x2000, scoped, tag = 'output window, operand 0']
    %8 = vsyncpa [#allocation3], 0
    %s9 = scalar_lea.sflag [#allocation3], 1
    %10 = vsyncpa %s9, 0
    %11 = vsyncpa [#allocation6], 0
    %12 = vsyncpa [#allocation4], 0
    %s13 = scalar_lea.sflag [#allocation4], 1
    %14 = vsyncpa %s13, 0
    loop: start=0, step=1, limit=4
    $region2: #{tpu_custom_call.1} parent=1 // loop_pre_header
      _
    $region3: #{tpu_custom_call.1} parent=1 // loop_header
      %s16 = sphi 0, %s20
      %p17 = scmp.ge.s32.totalorder %s16, 4
      %s23 = sphi 0, %s35
      %s24 = sphi 0, %s31
      %s25 = sphi 0, %s23
      %s26 = sphi 0, %s24
      %s27 = sphi 0, %s25
      %s28 = sphi 0, %s26
      %s40 = sphi 0, %s42
      %s43 = sphi 0, %s40
      %s44 = sphi 0, %s43
      %s60 = sphi 0, %s44
      %s64 = sphi 0, %s64
      %s66 = sphi 0, %s64
      %s67 = sphi 0, %s66
      %s81 = sphi 0, %s67
      %s85 = sphi 0, %s85
      %s87 = sphi 0, %s85
      %s88 = sphi 0, %s87
      %s102 = sphi 0, %s88
      %s110 = sphi 0, %s112
      %s113 = sphi 0, %s110
      %s114 = sphi 0, %s113
      %s130 = sphi 0, %s114
    $region4: #{tpu_custom_call.1} parent=1 // loop_header_branch
      %19 = sbr.rel (%p17) target = $region8
    $region5: #{tpu_custom_call.1} parent=1 // loop_body
      %s21 = ssub.s32 %s16, 1
      %s22 = ssub.s32 %s16, 2
      %s29 = sadd.s32 1, %s24
      %p30 = scmp.ge.s32.totalorder %s29, 1
      %s31 = scalar_select %p30, 0, %s29
      %s32 = sadd.s32 1, %s23
      %s33 = scalar_select %p30, %s32, %s23
      %p34 = scmp.ge.s32.totalorder %s33, 2
      %s35 = scalar_select %p34, 0, %s33
      %s36 = ssub.s32 %s23, %s35
      %s37 = ssub.s32 %s24, %s31
      %s38 = sor.u32 %s36, %s37
      %p39 = scmp.eq.s32.totalorder %s38, 0
      %s41 = sadd.s32 %s40, 1
      %s42 = scalar_select %p39, %s40, %s41
      %p45 = pneg %p39
      %p46 = scmp.eq.s32.totalorder %s16, 1
      %p47 = por %p45, %p46
      %p48 = scmp.ne.s32.totalorder %s40, %s43
      %p49 = scmp.eq.s32.totalorder %s16, 0
      %p50 = por %p48, %p49
      %p51 = scmp.ne.s32.totalorder %s40, %s43
      %p52 = scmp.eq.s32.totalorder %s21, 1
      %p53 = por %p51, %p52
      %p54 = scmp.ne.s32.totalorder %s43, %s44
      %p55 = scmp.eq.s32.totalorder %s21, 0
      %p56 = por %p54, %p55
      %p57 = scmp.ne.s32.totalorder %s43, %s44
      %p58 = scmp.eq.s32.totalorder %s22, 1
      %p59 = por %p57, %p58
      %p61 = scmp.ne.s32.totalorder %s44, %s60
      %p62 = scmp.eq.s32.totalorder %s22, 0
      %p63 = por %p61, %p62
      %s65 = sadd.s32 %s64, 1
      %p68 = scmp.eq.s32.totalorder %s16, 1
      %p69 = scmp.ne.s32.totalorder %s64, %s66
      %p70 = scmp.eq.s32.totalorder %s16, 0
      %p71 = por %p69, %p70
      %p72 = scmp.ne.s32.totalorder %s64, %s66
      %p73 = scmp.eq.s32.totalorder %s21, 1
      %p74 = por %p72, %p73
      %p75 = scmp.ne.s32.totalorder %s66, %s67
      %p76 = scmp.eq.s32.totalorder %s21, 0
      %p77 = por %p75, %p76
      %p78 = scmp.ne.s32.totalorder %s66, %s67
      %p79 = scmp.eq.s32.totalorder %s22, 1
      %p80 = por %p78, %p79
      %p82 = scmp.ne.s32.totalorder %s67, %s81
      %p83 = scmp.eq.s32.totalorder %s22, 0
      %p84 = por %p82, %p83
      %s86 = sadd.s32 %s85, 1
      %p89 = scmp.eq.s32.totalorder %s16, 1
      %p90 = scmp.ne.s32.totalorder %s85, %s87
      %p91 = scmp.eq.s32.totalorder %s16, 0
      %p92 = por %p90, %p91
      %p93 = scmp.ne.s32.totalorder %s85, %s87
      %p94 = scmp.eq.s32.totalorder %s21, 1
      %p95 = por %p93, %p94
      %p96 = scmp.ne.s32.totalorder %s87, %s88
      %p97 = scmp.eq.s32.totalorder %s21, 0
      %p98 = por %p96, %p97
      %p99 = scmp.ne.s32.totalorder %s87, %s88
      %p100 = scmp.eq.s32.totalorder %s22, 1
      %p101 = por %p99, %p100
      %p103 = scmp.ne.s32.totalorder %s88, %s102
      %p104 = scmp.eq.s32.totalorder %s22, 0
      %p105 = por %p103, %p104
      %s106 = ssub.s32 %s23, %s35
      %s107 = ssub.s32 %s24, %s31
      %s108 = sor.u32 %s106, %s107
      %p109 = scmp.eq.s32.totalorder %s108, 0
      %s111 = sadd.s32 %s110, 1
      %s112 = scalar_select %p109, %s110, %s111
      %p115 = pneg %p109
      %p116 = scmp.eq.s32.totalorder %s16, 1
      %p117 = por %p115, %p116
      %p118 = scmp.ne.s32.totalorder %s110, %s113
      %p119 = scmp.eq.s32.totalorder %s16, 0
      %p120 = por %p118, %p119
      %p121 = scmp.ne.s32.totalorder %s110, %s113
      %p122 = scmp.eq.s32.totalorder %s21, 1
      %p123 = por %p121, %p122
      %p124 = scmp.ne.s32.totalorder %s113, %s114
      %p125 = scmp.eq.s32.totalorder %s21, 0
      %p126 = por %p124, %p125
      %p127 = scmp.ne.s32.totalorder %s113, %s114
      %p128 = scmp.eq.s32.totalorder %s22, 1
      %p129 = por %p127, %p128
      %p131 = scmp.ne.s32.totalorder %s114, %s130
      %p132 = scmp.eq.s32.totalorder %s22, 0
      %p133 = por %p131, %p132
      %p134 = scmp.le.s32.totalorder 1, %s16
      %p135 = scmp.lt.s32.totalorder %s16, 3
      %p136 = pnand %p134, %p135
      %p137 = pneg %p136
      // Predicated region
      $region9: #{tpu_custom_call.1} parent=5 // pred_check
        _
      $region10: #{tpu_custom_call.1} parent=5 // pred_check_branch
        %139 = sbr.rel (%p136) target = $region12
      $region11: #{tpu_custom_call.1} parent=5 // pred_region
        %s140 = ssub.s32 %s16, 1
        // Predicated region
        $region13: #{tpu_custom_call.1} parent=11 // pred_check
          %p141 = pneg %p77
        $region14: #{tpu_custom_call.1} parent=11 // pred_check_branch
          %143 = sbr.rel (%p141) target = $region16
        $region15: #{tpu_custom_call.1} parent=11 // pred_region
          %s145 = ssub.s32 512, 512
          %146 = vsyncadd [#allocation6], %s145
          %s147 = sshll.u32 [#allocation5], 4
          %s148 = int_to_ptr.vmem [resolvable:$true] %s147
          %153 = dma.hbm_to_vmem [thread:$0]  %s1, 512, %s148, [#allocation6], 128, 128, 8
        $region16: #{tpu_custom_call.1} parent=11 // pred_fallthru
          _
        // Predicated region
        $region17: #{tpu_custom_call.1} parent=11 // pred_check
          %p154 = pneg %p98
        $region18: #{tpu_custom_call.1} parent=11 // pred_check_branch
          %156 = sbr.rel (%p154) target = $region20
        $region19: #{tpu_custom_call.1} parent=11 // pred_region
          %s158 = ssub.s32 16, 16
          %159 = vsyncadd [#allocation6], %s158
          %s161 = sshll.u32 [#allocation7], 4
          %s162 = int_to_ptr.vmem [resolvable:$true] %s161
          %164 = dma.hbm_to_vmem [thread:$0]  %s2, 16, %s162, [#allocation6]
        $region20: #{tpu_custom_call.1} parent=11 // pred_fallthru
          _
      $region12: #{tpu_custom_call.1} parent=5 // pred_fallthru
        _
      %p165 = scmp.lt.s32.totalorder %s16, 2
      // Predicated region
      $region21: #{tpu_custom_call.1} parent=5 // pred_check
        %p166 = pneg %p165
      $region22: #{tpu_custom_call.1} parent=5 // pred_check_branch
        %168 = sbr.rel (%p166) target = $region24
      $region23: #{tpu_custom_call.1} parent=5 // pred_region
        // Predicated region
        $region25: #{tpu_custom_call.1} parent=23 // pred_check
          %p169 = pneg %p50
        $region26: #{tpu_custom_call.1} parent=23 // pred_check_branch
          %171 = sbr.rel (%p169) target = $region28
        $region27: #{tpu_custom_call.1} parent=23 // pred_region
          %s172 = sand.u32 %s40, 1
          %s173 = scalar_lea.sflag [#allocation3], %s172
          %s174 = sand.u32 %s40, 1
          %s175 = smul.addr %s174, 8
          %s176 = scalar_lea.vmem [#allocation2], %s175
          %s178 = ssub.s32 128, 128
          %179 = vsyncadd %s173, %s178
          %s180 = sadd.s32 %s24, %s23
          %s181 = smul.addr %s180, 128
          %s182 = scalar_lea.hbm %s0, %s181
          %s184 = sshll.u32 %s176, 4
          %s185 = int_to_ptr.vmem [resolvable:$true] %s184
          %187 = dma.hbm_to_vmem [thread:$0]  %s182, 128, %s185, %s173
        $region28: #{tpu_custom_call.1} parent=23 // pred_fallthru
          _
      $region24: #{tpu_custom_call.1} parent=5 // pred_fallthru
        _
      %p188 = scmp.le.s32.totalorder 1, %s16
      %p189 = scmp.lt.s32.totalorder %s16, 3
      %p190 = pnand %p188, %p189
      %p191 = pneg %p190
      // Predicated region
      $region29: #{tpu_custom_call.1} parent=5 // pred_check
        _
      $region30: #{tpu_custom_call.1} parent=5 // pred_check_branch
        %193 = sbr.rel (%p190) target = $region32
      $region31: #{tpu_custom_call.1} parent=5 // pred_region
        %s194 = ssub.s32 %s16, 1
        %s195 = sand.u32 %s43, 1
        %s196 = scalar_lea.sflag [#allocation3], %s195
        %s197 = sand.u32 %s43, 1
        %s198 = smul.addr %s197, 8
        %s199 = scalar_lea.vmem [#allocation2], %s198
        // Predicated region
        $region33: #{tpu_custom_call.1} parent=31 // pred_check
          %p200 = pneg %p56
        $region34: #{tpu_custom_call.1} parent=31 // pred_check_branch
          %202 = sbr.rel (%p200) target = $region36
        $region35: #{tpu_custom_call.1} parent=31 // pred_region
          %203 = dma.done %s196, 128
        $region36: #{tpu_custom_call.1} parent=31 // pred_fallthru
          _
        // Predicated region
        $region37: #{tpu_custom_call.1} parent=31 // pred_check
          %p204 = pneg %p77
        $region38: #{tpu_custom_call.1} parent=31 // pred_check_branch
          %206 = sbr.rel (%p204) target = $region40
        $region39: #{tpu_custom_call.1} parent=31 // pred_region
          %207 = dma.done [#allocation6], 512
        $region40: #{tpu_custom_call.1} parent=31 // pred_fallthru
          _
        // Predicated region
        $region41: #{tpu_custom_call.1} parent=31 // pred_check
          %p208 = pneg %p98
        $region42: #{tpu_custom_call.1} parent=31 // pred_check_branch
          %210 = sbr.rel (%p208) target = $region44
        $region43: #{tpu_custom_call.1} parent=31 // pred_region
          %211 = dma.done [#allocation6], 16
        $region44: #{tpu_custom_call.1} parent=31 // pred_fallthru
          _
        %s212 = sand.u32 %s43, 1
        %s213 = scalar_lea.sflag [#allocation3], %s212
        %s214 = sand.u32 %s43, 1
        %s215 = smul.addr %s214, 8
        %s216 = scalar_lea.vmem [#allocation2], %s215
        %p217 = pneg %p56
        %p218 = pneg %p53
        %p219 = pneg %p77
        %p220 = pneg %p74
        %p221 = pneg %p98
        %p222 = pneg %p95
        %p223 = pneg %p126
        %p224 = pneg %p123
        %s225 = sand.u32 %s113, 1
        %s226 = scalar_lea.sflag [#allocation4], %s225
        %s227 = sand.u32 %s113, 1
        %s228 = smul.addr %s227, 8
        %s229 = scalar_lea.vmem [#allocation8], %s228
        %v230 = vld [vmem:[%s199] sm:$0xff]
        %v231 = vld [vmem:[#allocation5] sm:$0xff]
        %v232 = vld [vmem:[#allocation5 + $0x8] sm:$0xff]
        %v233 = vld [vmem:[#allocation5 + $0x10] sm:$0xff]
        %v234 = vld [vmem:[#allocation5 + $0x18] sm:$0xff]
        %v235 = vld [vmem:[#allocation7] sm:$0x1]
        %v237 = vlaneseq
        %v238 = vshrl.u32 %v237, 7
        %v239 = vsub.s32 0, %v238
        %v240 = vrot.slane %v235, %v239
        %vm242 = vcmask 261120
        %v244 = vsel %vm242, %v230, 0
        %246 = vmatprep.subr.mxu0 0.0
        %247 = vmatpush1.msra.mxu0 %v231
        %248 = vmatprep.subr.mxu0 0.0
        %249 = vmatpush1.msra.mxu0 %v232
        %250 = vmatprep.subr.mxu0 0.0
        %251 = vmatpush1.msra.mxu0 %v233
        %252 = vmatprep.subr.mxu0 0.0
        %253 = vmatpush1.msra.mxu0 %v234
        %254 = vmatprep.subr.mxu0 0.0
        %255 = vmatpush1.msra.mxu0 0.0
        %256 = vmatprep.subr.mxu0 0.0
        %257 = vmatpush1.msra.mxu0 0.0
        %258 = vmatprep.subr.mxu0 0.0
        %259 = vmatpush1.msra.mxu0 0.0
        %260 = vmatprep.subr.mxu0 0.0
        %261 = vmatpush1.msra.mxu0 0.0
        %262 = vmatprep.subr.mxu0 0.0
        %263 = vmatpush1.msra.mxu0 0.0
        %264 = vmatprep.subr.mxu0 0.0
        %265 = vmatpush1.msra.mxu0 0.0
        %266 = vmatprep.subr.mxu0 0.0
        %267 = vmatpush1.msra.mxu0 0.0
        %268 = vmatprep.subr.mxu0 0.0
        %269 = vmatpush1.msra.mxu0 0.0
        %270 = vmatprep.subr.mxu0 0.0
        %271 = vmatpush1.msra.mxu0 0.0
        %272 = vmatprep.subr.mxu0 0.0
        %273 = vmatpush1.msra.mxu0 0.0
        %274 = vmatprep.subr.mxu0 0.0
        %275 = vmatpush1.msra.mxu0 0.0
        %276 = vmatprep.subr.mxu0 0.0
        %277 = vmatpush1.msra.mxu0 0.0
        %278 = vmatprep.subr.mxu0 0.0
        %279 = vmatpush1.msra.mxu0 0.0
        %280 = vmatprep.subr.mxu0 0.0
        %281 = vmatpush1.msra.mxu0 0.0
        %282 = vmatprep.subr.mxu0 0.0
        %283 = vmatpush1.msra.mxu0 0.0
        %284 = vmatprep.subr.mxu0 0.0
        %285 = vmatpush1.msra.mxu0 0.0
        %286 = vmatprep.subr.mxu0 0.0
        %287 = vmatpush1.msra.mxu0 0.0
        %288 = vmatprep.subr.mxu0 0.0
        %289 = vmatpush1.msra.mxu0 0.0
        %290 = vmatprep.subr.mxu0 0.0
        %291 = vmatpush1.msra.mxu0 0.0
        %292 = vmatprep.subr.mxu0 0.0
        %293 = vmatpush1.msra.mxu0 0.0
        %294 = vmatprep.subr.mxu0 0.0
        %295 = vmatpush1.msra.mxu0 0.0
        %296 = vmatprep.subr.mxu0 0.0
        %297 = vmatpush1.msra.mxu0 0.0
        %298 = vmatprep.subr.mxu0 0.0
        %299 = vmatpush1.msra.mxu0 0.0
        %300 = vmatprep.subr.mxu0 0.0
        %301 = vmatpush1.msra.mxu0 0.0
        %302 = vmatprep.subr.mxu0 0.0
        %303 = vmatpush1.msra.mxu0 0.0
        %304 = vmatprep.subr.mxu0 0.0
        %305 = vmatpush1.msra.mxu0 0.0
        %306 = vmatprep.subr.mxu0 0.0
        %307 = vmatpush1.msra.mxu0 0.0
        %308 = vmatprep.subr.mxu0 0.0
        %309 = vmatpush1.msra.mxu0 0.0
        %310 = vmatprep.mubr.f32.mxu0 0.0
        %311 = vmatmul.mubr.f32.gmra.mrb[0].mxu0 %v244
        %v312 = vpop.f32.mrb[0].mxu0
        %v313 = vadd.f32 %v240, %v312
        %v314 = vpop.f32.mrb[0].mxu0
        %315 = vdwg.mxu0
        %316 = vst.msk [vmem:[%s229] sm:$0xff] %vm242, %v313
        %s317 = sand.u32 %s113, 1
        %s318 = scalar_lea.sflag [#allocation4], %s317
        %s319 = sand.u32 %s113, 1
        %s320 = smul.addr %s319, 8
        %s321 = scalar_lea.vmem [#allocation8], %s320
        // Predicated region
        $region45: #{tpu_custom_call.1} parent=31 // pred_check
          %p322 = pneg %p123
        $region46: #{tpu_custom_call.1} parent=31 // pred_check_branch
          %324 = sbr.rel (%p322) target = $region48
        $region47: #{tpu_custom_call.1} parent=31 // pred_region
          %s326 = ssub.s32 128, 128
          %327 = vsyncadd %s318, %s326
          %s328 = sadd.s32 %s26, %s25
          %s329 = smul.addr %s328, 128
          %s330 = scalar_lea.hbm %s3, %s329
          %s332 = sshll.u32 %s321, 4
          %s333 = int_to_ptr.vmem [resolvable:$true] %s332
          %335 = dma.vmem_to_hbm [thread:$0]  %s333, 128, %s330, %s318
        $region48: #{tpu_custom_call.1} parent=31 // pred_fallthru
          _
      $region32: #{tpu_custom_call.1} parent=5 // pred_fallthru
        _
      %p336 = scmp.le.s32.totalorder 2, %s16
      // Predicated region
      $region49: #{tpu_custom_call.1} parent=5 // pred_check
        %p337 = pneg %p336
      $region50: #{tpu_custom_call.1} parent=5 // pred_check_branch
        %339 = sbr.rel (%p337) target = $region52
      $region51: #{tpu_custom_call.1} parent=5 // pred_region
        %s340 = ssub.s32 %s16, 2
        // Predicated region
        $region53: #{tpu_custom_call.1} parent=51 // pred_check
          %p341 = pneg %p129
        $region54: #{tpu_custom_call.1} parent=51 // pred_check_branch
          %343 = sbr.rel (%p341) target = $region56
        $region55: #{tpu_custom_call.1} parent=51 // pred_region
          %s344 = sand.u32 %s114, 1
          %s345 = scalar_lea.sflag [#allocation4], %s344
          %s346 = sand.u32 %s114, 1
          %s347 = smul.addr %s346, 8
          %s348 = scalar_lea.vmem [#allocation8], %s347
          %349 = dma.done %s345, 128
        $region56: #{tpu_custom_call.1} parent=51 // pred_fallthru
          _
      $region52: #{tpu_custom_call.1} parent=5 // pred_fallthru
        _
    $region6: #{tpu_custom_call.1} parent=1 // loop_footer
      %s20 = sadd.s32 1, %s16
    $region7: #{tpu_custom_call.1} parent=1 // loop_footer_branch
      %15 = sbr.rel target = $region3
    $region8: #{tpu_custom_call.1} parent=1 // loop_exit
      _
    %350 = vsyncpa [#allocation3], 1
    %s351 = scalar_lea.sflag [#allocation3], 1
    %352 = vsyncpa %s351, 1
    %353 = vsyncpa [#allocation6], 1
    %354 = vsyncpa [#allocation4], 1
    %s355 = scalar_lea.sflag [#allocation4], 1
    %356 = vsyncpa %s355, 1

</llo_original>
